<compile_context>
chip_gen: v6e
topology: v6e:2x2x1
jax: 0.10.0
libtpu: 0.0.40
codegen_flags: <defaults>
</compile_context>

<pallas_src>
import jax
import jax.numpy as jnp
from jax.experimental import pallas as pl
from jax.experimental.pallas import tpu as pltpu  # noqa: F401  (TPU backend)

_MAX_TILE_BYTES = 4 * 1024 * 1024  # ~4 MiB per buffer: HBM-roofline plateau, v7x-safe


def _copy_kernel(src_ref, dst_ref):
    # Identity pass-through of the current block.
    dst_ref[...] = src_ref[...]


def _pick_tile_rows(rows, max_rows):
    """Largest legal row-tile: full array if it fits, else the biggest
    8-aligned divisor of `rows` that stays under the per-buffer budget."""
    if rows <= max_rows:
        return rows                      # single full-extent block (always legal)
    t = (max_rows // 8) * 8
    while t >= 8:
        if rows % t == 0:
            return t
        t -= 8
    return rows                          # no 8-aligned divisor: one full block


def _identity_copy_pallas(x):
    """Identity through a pallas_call: lane-dense flat view, large tiles,
    output aliased onto the input buffer."""
    total = x.size
    orig_shape, dtype = x.shape, x.dtype

    if total % 128 == 0:
        rows = total // 128
        flat = x.reshape(rows, 128)      # contiguous -> free reshape, lane-dense
        max_rows = max(8, _MAX_TILE_BYTES // (128 * dtype.itemsize))
        tile_rows = _pick_tile_rows(rows, max_rows)
        out = pl.pallas_call(
            _copy_kernel,
            out_shape=jax.ShapeDtypeStruct((rows, 128), dtype),
            grid=(rows // tile_rows,),
            in_specs=[pl.BlockSpec((tile_rows, 128), lambda i: (i, 0))],
            out_specs=pl.BlockSpec((tile_rows, 128), lambda i: (i, 0)),
            input_output_aliases={0: 0},
        )(flat)
        return out.reshape(orig_shape)

    # Degenerate case (element count not a multiple of 128): copy the whole
    # array as one block (block == full dims, so the (8,128) rule is moot).
    return pl.pallas_call(
        _copy_kernel,
        out_shape=jax.ShapeDtypeStruct(orig_shape, dtype),
        input_output_aliases={0: 0},
    )(x)


def dummy_decoder_forward_reference(tgt, memory, tgt_mask, memory_mask,
                                    tgt_key_padding_mask,
                                    memory_key_padding_mask):
    """Optimal DummyDecoder: a pure identity needs no kernel at all."""
    return memory


def dummy_decoder_forward(tgt, memory, tgt_mask, memory_mask,
                          tgt_key_padding_mask, memory_key_padding_mask):
    """Pallas equivalent of DummyDecoder.forward: returns `memory`.

    All other arguments are accepted for signature parity and ignored,
    exactly as the PyTorch module does.
    """
    return _identity_copy_pallas(memory)


if __name__ == "__main__":
    key = jax.random.PRNGKey(0)
    k_tgt, k_mem = jax.random.split(key)

    S, B, D = 8, 2, 32  # seq, batch, d_model (small, nn.Transformer (S,B,D) layout)
    tgt = jax.random.normal(k_tgt, (S, B, D), dtype=jnp.float32)
    memory = jax.random.normal(k_mem, (S, B, D), dtype=jnp.float32)

    # Masks as a transformer decoder would receive them (ignored by forward).
    tgt_mask = jnp.zeros((S, S), dtype=jnp.float32)
    memory_mask = jnp.zeros((S, S), dtype=jnp.float32)
    tgt_key_padding_mask = jnp.zeros((B, S), dtype=jnp.bool_)
    memory_key_padding_mask = jnp.zeros((B, S), dtype=jnp.bool_)

    out = dummy_decoder_forward(tgt, memory, tgt_mask, memory_mask,
                                tgt_key_padding_mask, memory_key_padding_mask)
    out = jax.block_until_ready(out)

    assert out.shape == memory.shape and out.dtype == memory.dtype
    assert bool(jnp.array_equal(out, memory))

    # Zero-cost reference path agrees trivially as well.
    ref = dummy_decoder_forward_reference(tgt, memory, tgt_mask, memory_mask,
                                          tgt_key_padding_mask,
                                          memory_key_padding_mask)
    assert bool(jnp.array_equal(out, ref))
    print("KERNEL_OK")
</pallas_src>

<mosaic_0001>
module attributes {stable_mosaic.version = 11 : i64} {
  func.func @_copy_kernel(%arg0: i32, %arg1: memref<4x128xf32, #tpu.memory_space<vmem>>, %arg2: memref<4x128xf32, #tpu.memory_space<vmem>>) attributes {dimension_semantics = [#tpu.dimension_semantics<arbitrary>], iteration_bounds = array<i64: 1>, scalar_prefetch = 0 : i64, scratch_operands = 0 : i64, tpu.core_type = #tpu.core_type<tc>, window_params = [{transform_indices = @transform_0, window_bounds = array<i64: 4, 128>}, {transform_indices = @transform_1, window_bounds = array<i64: 4, 128>}]} {
    %c0 = arith.constant 0 : index
    %c0_0 = arith.constant 0 : index
    %0 = vector.load %arg1[%c0, %c0_0] : memref<4x128xf32, #tpu.memory_space<vmem>>, vector<4x128xf32>
    %c0_1 = arith.constant 0 : index
    %c0_2 = arith.constant 0 : index
    %1 = vector.load %arg2[%c0_1, %c0_2] : memref<4x128xf32, #tpu.memory_space<vmem>>, vector<4x128xf32>
    tpu.vector_store %arg2[%c0_1, %c0_2], %0 {strides = array<i32>} : memref<4x128xf32, #tpu.memory_space<vmem>>, vector<4x128xf32>,
    return
  }
  func.func @transform_0(%arg0: i32) -> (i32, i32) {
    %c0_i32 = arith.constant 0 : i32
    %c0_i32_0 = arith.constant 0 : i32
    return %arg0, %c0_i32 : i32, i32
  }
  func.func @transform_1(%arg0: i32) -> (i32, i32) {
    %c0_i32 = arith.constant 0 : i32
    %c0_i32_0 = arith.constant 0 : i32
    return %arg0, %c0_i32 : i32, i32
  }
}

</mosaic_0001>

<llo_original>
// kernel: tpu_custom_call.1
$region0: #{tpu_custom_call.1}
  #allocation0 [shape = 'u32[]', space=smem, size = 0x4, offset = 0x4, fixed_abs, tag = 'smem constant byte address 0x4 - core index']
  #allocation1 [shape = 'u32[144,128]{1,0:T(1,128)}', space=vmem, size = 0x12000, scoped, tag = 'internal scratch']
  %s0 = inlined_call_operand.hbm [shape: f32[4,128], index: 0, kind: input, shape index: {}, may-alias: {0,1}]
  %s1 = inlined_call_operand.hbm [shape: f32[4,128], index: 1, kind: output, shape index: {}, may-alias: {0,1}]
  %s2 = sld [smem:[#allocation0]]
  $region18: #{tpu_custom_call.1} parent=0
    _
  %s4 = ssub.s32 1, %s2
  %s5 = scalar_select 0, %s4, %s2
  $region1: #{tpu_custom_call.1} parent=0
    #allocation2 [shape = 'u8[2048]{0}', space=vmem, size = 0x800, scoped, tag = 'input window, operand 0, single buffered']
    #allocation3 [shape = 's32[1]{0}', space=sflag, size = 0x4, scoped, tag = 'scoped memory for tpu_custom_call.1']
    #allocation4 [shape = 's32[1]{0}', space=sflag, size = 0x4, scoped, tag = 'scoped memory for tpu_custom_call.1']
    #allocation5 [shape = 'u8[2048]{0}', space=vmem, size = 0x800, scoped, tag = 'output window, operand 0, single buffered']
    %6 = vsyncpa [#allocation3], 0
    %7 = vsyncpa [#allocation4], 0
    // Predicated region
    $region2: #{tpu_custom_call.1} parent=1 // pred_check
      _
    $region3: #{tpu_custom_call.1} parent=1 // pred_check_branch
      %9 = sbr.rel (0) target = $region5
    $region4: #{tpu_custom_call.1} parent=1 // pred_region
      %s11 = ssub.s32 64, 64
      %12 = vsyncadd [#allocation3], %s11
      %s14 = sshll.u32 [#allocation2], 4
      %s15 = int_to_ptr.vmem [resolvable:$true] %s14
      %17 = dma.hbm_to_vmem [thread:$0]  %s0, 64, %s15, [#allocation3]
    $region5: #{tpu_custom_call.1} parent=1 // pred_fallthru
      _
    // Predicated region
    $region6: #{tpu_custom_call.1} parent=1 // pred_check
      _
    $region7: #{tpu_custom_call.1} parent=1 // pred_check_branch
      %19 = sbr.rel (0) target = $region9
    $region8: #{tpu_custom_call.1} parent=1 // pred_region
      %20 = dma.done [#allocation3], 64
    $region9: #{tpu_custom_call.1} parent=1 // pred_fallthru
      _
    %v21 = vld [vmem:[#allocation2] sm:$0xf]
    %22 = vst [vmem:[#allocation5] sm:$0xf] %v21
    // Predicated region
    $region10: #{tpu_custom_call.1} parent=1 // pred_check
      _
    $region11: #{tpu_custom_call.1} parent=1 // pred_check_branch
      %24 = sbr.rel (0) target = $region13
    $region12: #{tpu_custom_call.1} parent=1 // pred_region
      %s26 = ssub.s32 64, 64
      %27 = vsyncadd [#allocation4], %s26
      %s29 = sshll.u32 [#allocation5], 4
      %s30 = int_to_ptr.vmem [resolvable:$true] %s29
      %32 = dma.vmem_to_hbm [thread:$0]  %s30, 64, %s1, [#allocation4]
    $region13: #{tpu_custom_call.1} parent=1 // pred_fallthru
      _
    // Predicated region
    $region14: #{tpu_custom_call.1} parent=1 // pred_check
      _
    $region15: #{tpu_custom_call.1} parent=1 // pred_check_branch
      %34 = sbr.rel (0) target = $region17
    $region16: #{tpu_custom_call.1} parent=1 // pred_region
      %35 = dma.done [#allocation4], 64
    $region17: #{tpu_custom_call.1} parent=1 // pred_fallthru
      _
    %36 = vsyncpa [#allocation3], 1
    %37 = vsyncpa [#allocation4], 1

</llo_original>
